<compile_context>
chip_gen: v5e
topology: v5e:2x2
jax: 0.10.0
libtpu: 0.0.40
codegen_flags: <defaults>
</compile_context>

<pallas_src>
import jax
import jax.numpy as jnp
from jax import lax
from jax.experimental import pallas as pl
from jax.experimental.pallas import tpu as pltpu

DIM_AUD = 32
SEQ_LEN = 8
CONV_CHANNELS = [DIM_AUD, 16, 8, 4, 2, 1]
LEAKY_SLOPE = 0.02          # module uses LeakyReLU(0.02, True)


def audio_attn_kernel(x_ref, w0_ref, wr_ref, b_ref, wlt_ref, blin_ref,
                      r_ref, s_ref, out_ref):
    L = SEQ_LEN
    D = x_ref.shape[1] // L

    x = x_ref[...]                                           # (TB, L*D), lane = l*D + d

    # ---- conv stack: one banded matmul per layer (lane-major activations) ----
    acc = jnp.dot(x, w0_ref[...], preferred_element_type=jnp.float32) + b_ref[0]
    y = jnp.maximum(acc, LEAKY_SLOPE * acc)                  # (TB, 128)

    for k, cout in enumerate(CONV_CHANNELS[2:]):             # layers 1..4
        cin = CONV_CHANNELS[k + 1]
        K, N = L * cin, L * cout
        w = wr_ref[k][:K, :N]                                # (L*cin, L*cout)
        acc = (jnp.dot(y, w, preferred_element_type=jnp.float32)
               + b_ref[k + 1][:, :N])
        y = jnp.maximum(acc, LEAKY_SLOPE * acc)              # (TB, L*cout)

    # y: (TB, L) conv scores, lane l = sequence position l.
    # ---- attention Linear(L->L) + softmax over lanes ----
    z = jnp.dot(y, wlt_ref[...], preferred_element_type=jnp.float32) + blin_ref[...]
    z = z - jnp.max(z, axis=1, keepdims=True)
    e = jnp.exp(z)
    att = e / jnp.sum(e, axis=1, keepdims=True)              # (TB, L)

    # ---- weighted sum over positions, all on the MXU:  out = ((att @ R) * x) @ S ----
    # R[l, l*D+d] = 1 replicates att[b,l] across the D lanes of position l;
    # S[l*D+d, d] = 1 reduces the per-position products back to (TB, D).
    att_wide = jnp.dot(att, r_ref[...], preferred_element_type=jnp.float32)   # (TB, L*D)
    out = jnp.dot(att_wide * x, s_ref[...], preferred_element_type=jnp.float32)
    out_ref[...] = out.astype(out_ref.dtype)                 # (TB, D)


def _band_weight(w, stride_in):
    """Block-banded matmul weight for Conv1d(k=3, stride=1, pad=1).

    w: (cout, cin, 3).  Returns (SEQ_LEN*stride_in, SEQ_LEN*cout) with
    Wb[li*stride_in + ci, lo*cout + co] = w[co, ci, (li-lo)+1] for |li-lo| <= 1.
    Rows stride_in > cin (layer 0 with D > dim_aud) stay zero -> non-audio
    features are ignored by the conv, matching x[..., :dim_aud].
    """
    cout, cin, _ = w.shape
    wt = jnp.transpose(w, (1, 0, 2)).astype(jnp.float32)     # (cin, cout, 3)
    Wb = jnp.zeros((SEQ_LEN * stride_in, SEQ_LEN * cout), jnp.float32)
    for lo in range(SEQ_LEN):
        for t in (-1, 0, 1):
            li = lo + t
            if 0 <= li < SEQ_LEN:
                Wb = Wb.at[li * stride_in: li * stride_in + cin,
                           lo * cout: (lo + 1) * cout].set(wt[:, :, t + 1])
    return Wb


def _pack_conv_params(convs, D):
    """Pack the 5 conv layers into banded weights + position-widened biases."""
    L = SEQ_LEN
    w0 = _band_weight(convs[0][0], D)                        # (L*D, 128)
    wr = jnp.zeros((4, L * 16, L * 8), jnp.float32)          # (4, 128, 64) zero-padded
    b_all = jnp.zeros((len(convs), 1, L * 16), jnp.float32)  # (5, 1, 128) zero-padded
    b_all = b_all.at[0, 0, :L * convs[0][0].shape[0]].set(
        jnp.tile(convs[0][1].astype(jnp.float32), L))
    for k in range(1, len(convs)):
        w, b = convs[k]
        cout, cin, _ = w.shape
        wr = wr.at[k - 1, :L * cin, :L * cout].set(_band_weight(w, cin))
        b_all = b_all.at[k, 0, :L * cout].set(jnp.tile(b.astype(jnp.float32), L))
    return w0, wr, b_all


def _round_up(x, m):
    return ((x + m - 1) // m) * m


def _pick_tb(B, D, tb_cap):
    """Batch tile: VMEM-budgeted, multiple of 8, even grid-step count when B >= 32."""
    budget = 18 << 20                                        # pipeline-block budget (bytes)
    per_elem = 4 * (3 * SEQ_LEN * D + 2 * D + 512)           # 2x in + 2x out + temporaries
    tb = min(tb_cap, max(budget // per_elem, 8), B)
    if B <= 8:
        return max(B, 1)                                     # single full block
    tb = max(tb - tb % 8, 8)
    if B >= 32:
        steps = pl.cdiv(B, tb)
        if steps % 2:                                        # balance the 2 v7x TensorCores
            steps += 1
            tb = max(8, _round_up(pl.cdiv(B, steps), 8))
    return tb


def audio_attn_net(x, params, tb_cap=1024):
    """x: (B, SEQ_LEN, D) with D >= DIM_AUD, float32. Returns (B, D)."""
    B, L, D = x.shape
    assert L == SEQ_LEN and D >= DIM_AUD

    xflat = x.reshape(B, L * D)                              # free (contiguous) reshape

    w0, wr, b_all = _pack_conv_params(params["convs"], D)
    wlin_t = params["lin_w"].T.astype(jnp.float32)           # (L, L)
    blin = params["lin_b"].reshape(1, L).astype(jnp.float32) # (1, L)
    rmat = jnp.repeat(jnp.eye(L, dtype=jnp.float32), D, axis=1)     # (L, L*D)
    smat = jnp.tile(jnp.eye(D, dtype=jnp.float32), (L, 1))          # (L*D, D)

    TB = _pick_tb(B, D, tb_cap)
    grid = (pl.cdiv(B, TB),)

    out = pl.pallas_call(
        audio_attn_kernel,
        out_shape=jax.ShapeDtypeStruct((B, D), x.dtype),
        grid=grid,
        in_specs=[
            pl.BlockSpec((TB, L * D), lambda g: (g, 0)),
            pl.BlockSpec(w0.shape, lambda g: (0, 0)),
            pl.BlockSpec(wr.shape, lambda g: (0, 0, 0)),
            pl.BlockSpec(b_all.shape, lambda g: (0, 0, 0)),
            pl.BlockSpec((L, L), lambda g: (0, 0)),
            pl.BlockSpec((1, L), lambda g: (0, 0)),
            pl.BlockSpec(rmat.shape, lambda g: (0, 0)),
            pl.BlockSpec(smat.shape, lambda g: (0, 0)),
        ],
        out_specs=pl.BlockSpec((TB, D), lambda g: (g, 0)),
        compiler_params=pltpu.CompilerParams(
            dimension_semantics=("parallel",),
            vmem_limit_bytes=32 << 20),
    )(xflat, w0, wr, b_all, wlin_t, blin, rmat, smat)
    return out


def init_params(key):
    """Deterministic synthetic parameters matching the module's __init__ shapes."""
    params = {"convs": []}
    n_layers = len(CONV_CHANNELS) - 1
    keys = jax.random.split(key, 2 * n_layers + 2)
    ki = 0
    for cin, cout in zip(CONV_CHANNELS[:-1], CONV_CHANNELS[1:]):
        bound = (cin * 3) ** -0.5
        w = jax.random.uniform(keys[ki], (cout, cin, 3), jnp.float32, -bound, bound)
        ki += 1
        b = jax.random.uniform(keys[ki], (cout,), jnp.float32, -bound, bound)
        ki += 1
        params["convs"].append((w, b))
    bound = SEQ_LEN ** -0.5
    params["lin_w"] = jax.random.uniform(keys[ki], (SEQ_LEN, SEQ_LEN), jnp.float32,
                                         -bound, bound)
    params["lin_b"] = jax.random.uniform(keys[ki + 1], (SEQ_LEN,), jnp.float32,
                                         -bound, bound)
    return params


def reference_forward(x, params):
    """Pure-JAX reference of the PyTorch forward (for correctness check)."""
    y = jnp.transpose(x[..., :DIM_AUD], (0, 2, 1))            # (B, C, L)
    for w, b in params["convs"]:
        y = lax.conv_general_dilated(
            y, w, window_strides=(1,), padding=[(1, 1)],
            dimension_numbers=("NCH", "OIH", "NCH"),
            precision=lax.Precision.HIGHEST)
        y = y + b[None, :, None]
        y = jnp.where(y >= 0, y, LEAKY_SLOPE * y)
    y = y.reshape(-1, SEQ_LEN)                                # (B, L)
    z = jnp.dot(y, params["lin_w"].T, precision=lax.Precision.HIGHEST) + params["lin_b"]
    att = jax.nn.softmax(z, axis=1)
    return jnp.sum(att[:, :, None] * x, axis=1)               # (B, D)


if __name__ == "__main__":
    key = jax.random.PRNGKey(0)
    kx, kp = jax.random.split(key)
    B = 64
    x = jax.random.normal(kx, (B, SEQ_LEN, DIM_AUD), jnp.float32)
    params = init_params(kp)

    out = jax.block_until_ready(audio_attn_net(x, params))
    ref = reference_forward(x, params)

    assert out.shape == (B, DIM_AUD), out.shape
    max_err = float(jnp.max(jnp.abs(out - ref)))
    assert jnp.allclose(out, ref, atol=1e-4, rtol=1e-4), f"max abs err {max_err}"
    print("KERNEL_OK")
</pallas_src>

<mosaic_0001>
module attributes {stable_mosaic.version = 11 : i64} {
  func.func @audio_attn_kernel(%arg0: i32, %arg1: memref<32x256xf32, #tpu.memory_space<vmem>>, %arg2: memref<256x128xf32, #tpu.memory_space<vmem>>, %arg3: memref<4x128x64xf32, #tpu.memory_space<vmem>>, %arg4: memref<5x1x128xf32, #tpu.memory_space<vmem>>, %arg5: memref<8x8xf32, #tpu.memory_space<vmem>>, %arg6: memref<1x8xf32, #tpu.memory_space<vmem>>, %arg7: memref<8x256xf32, #tpu.memory_space<vmem>>, %arg8: memref<256x32xf32, #tpu.memory_space<vmem>>, %arg9: memref<32x32xf32, #tpu.memory_space<vmem>>) attributes {dimension_semantics = [#tpu.dimension_semantics<parallel>], iteration_bounds = array<i64: 2>, scalar_prefetch = 0 : i64, scratch_operands = 0 : i64, tpu.core_type = #tpu.core_type<tc>, window_params = [{transform_indices = @transform_0, window_bounds = array<i64: 32, 256>}, {pipeline_mode = #tpu.pipeline_mode<synchronous>, transform_indices = @transform_1, window_bounds = array<i64: 256, 128>}, {pipeline_mode = #tpu.pipeline_mode<synchronous>, transform_indices = @transform_2, window_bounds = array<i64: 4, 128, 64>}, {pipeline_mode = #tpu.pipeline_mode<synchronous>, transform_indices = @transform_3, window_bounds = array<i64: 5, 1, 128>}, {pipeline_mode = #tpu.pipeline_mode<synchronous>, transform_indices = @transform_4, window_bounds = array<i64: 8, 8>}, {pipeline_mode = #tpu.pipeline_mode<synchronous>, transform_indices = @transform_5, window_bounds = array<i64: 1, 8>}, {pipeline_mode = #tpu.pipeline_mode<synchronous>, transform_indices = @transform_6, window_bounds = array<i64: 8, 256>}, {pipeline_mode = #tpu.pipeline_mode<synchronous>, transform_indices = @transform_7, window_bounds = array<i64: 256, 32>}, {transform_indices = @transform_8, window_bounds = array<i64: 32, 32>}]} {
    %c0 = arith.constant 0 : index
    %c0_0 = arith.constant 0 : index
    %0 = vector.load %arg1[%c0, %c0_0] : memref<32x256xf32, #tpu.memory_space<vmem>>, vector<32x256xf32>
    %c0_1 = arith.constant 0 : index
    %c0_2 = arith.constant 0 : index
    %1 = vector.load %arg2[%c0_1, %c0_2] : memref<256x128xf32, #tpu.memory_space<vmem>>, vector<256x128xf32>
    %cst = arith.constant dense<0.000000e+00> : vector<32x128xf32>
    %2 = tpu.matmul %0, %1, %cst {dimension_numbers = #tpu.dot_dimension_numbers<[1], [0], [0], [1], [0, 0, 1, 1], [], []>} : vector<32x256xf32>, vector<256x128xf32>, vector<32x128xf32> -> vector<32x128xf32>
    %c0_3 = arith.constant 0 : index
    %c0_4 = arith.constant 0 : index
    %c0_5 = arith.constant 0 : index
    %3 = vector.load %arg4[%c0_3, %c0_4, %c0_5] : memref<5x1x128xf32, #tpu.memory_space<vmem>>, vector<1x1x128xf32>
    %4 = vector.shape_cast %3 : vector<1x1x128xf32> to vector<1x128xf32>
    %5 = vector.broadcast %4 : vector<1x128xf32> to vector<32x128xf32>
    %6 = arith.addf %2, %5 : vector<32x128xf32>
    %cst_6 = arith.constant 2.000000e-02 : f32
    %7 = vector.broadcast %cst_6 : f32 to vector<32x128xf32>
    %8 = arith.mulf %7, %6 : vector<32x128xf32>
    %9 = arith.maximumf %6, %8 : vector<32x128xf32>
    %c0_7 = arith.constant 0 : index
    %c0_8 = arith.constant 0 : index
    %c0_9 = arith.constant 0 : index
    %10 = vector.load %arg3[%c0_7, %c0_8, %c0_9] : memref<4x128x64xf32, #tpu.memory_space<vmem>>, vector<1x128x64xf32>
    %11 = vector.shape_cast %10 : vector<1x128x64xf32> to vector<128x64xf32>
    %cst_10 = arith.constant dense<0.000000e+00> : vector<32x64xf32>
    %12 = tpu.matmul %9, %11, %cst_10 {dimension_numbers = #tpu.dot_dimension_numbers<[1], [0], [0], [1], [0, 0, 1, 1], [], []>} : vector<32x128xf32>, vector<128x64xf32>, vector<32x64xf32> -> vector<32x64xf32>
    %c1 = arith.constant 1 : index
    %c0_11 = arith.constant 0 : index
    %c0_12 = arith.constant 0 : index
    %13 = vector.load %arg4[%c1, %c0_11, %c0_12] : memref<5x1x128xf32, #tpu.memory_space<vmem>>, vector<1x1x128xf32>
    %14 = vector.shape_cast %13 : vector<1x1x128xf32> to vector<1x128xf32>
    %15 = vector.extract_strided_slice %14 {offsets = [0, 0], sizes = [1, 64], strides = [1, 1]} : vector<1x128xf32> to vector<1x64xf32>
    %16 = vector.broadcast %15 : vector<1x64xf32> to vector<32x64xf32>
    %17 = arith.addf %12, %16 : vector<32x64xf32>
    %cst_13 = arith.constant 2.000000e-02 : f32
    %18 = vector.broadcast %cst_13 : f32 to vector<32x64xf32>
    %19 = arith.mulf %18, %17 : vector<32x64xf32>
    %20 = arith.maximumf %17, %19 : vector<32x64xf32>
    %c1_14 = arith.constant 1 : index
    %c0_15 = arith.constant 0 : index
    %c0_16 = arith.constant 0 : index
    %21 = vector.load %arg3[%c1_14, %c0_15, %c0_16] : memref<4x128x64xf32, #tpu.memory_space<vmem>>, vector<1x128x64xf32>
    %22 = vector.shape_cast %21 : vector<1x128x64xf32> to vector<128x64xf32>
    %23 = vector.extract_strided_slice %22 {offsets = [0, 0], sizes = [64, 32], strides = [1, 1]} : vector<128x64xf32> to vector<64x32xf32>
    %cst_17 = arith.constant dense<0.000000e+00> : vector<32x32xf32>
    %24 = tpu.matmul %20, %23, %cst_17 {dimension_numbers = #tpu.dot_dimension_numbers<[1], [0], [0], [1], [0, 0, 1, 1], [], []>} : vector<32x64xf32>, vector<64x32xf32>, vector<32x32xf32> -> vector<32x32xf32>
    %c2 = arith.constant 2 : index
    %c0_18 = arith.constant 0 : index
    %c0_19 = arith.constant 0 : index
    %25 = vector.load %arg4[%c2, %c0_18, %c0_19] : memref<5x1x128xf32, #tpu.memory_space<vmem>>, vector<1x1x128xf32>
    %26 = vector.shape_cast %25 : vector<1x1x128xf32> to vector<1x128xf32>
    %27 = vector.extract_strided_slice %26 {offsets = [0, 0], sizes = [1, 32], strides = [1, 1]} : vector<1x128xf32> to vector<1x32xf32>
    %28 = vector.broadcast %27 : vector<1x32xf32> to vector<32x32xf32>
    %29 = arith.addf %24, %28 : vector<32x32xf32>
    %cst_20 = arith.constant 2.000000e-02 : f32
    %30 = vector.broadcast %cst_20 : f32 to vector<32x32xf32>
    %31 = arith.mulf %30, %29 : vector<32x32xf32>
    %32 = arith.maximumf %29, %31 : vector<32x32xf32>
    %c2_21 = arith.constant 2 : index
    %c0_22 = arith.constant 0 : index
    %c0_23 = arith.constant 0 : index
    %33 = vector.load %arg3[%c2_21, %c0_22, %c0_23] : memref<4x128x64xf32, #tpu.memory_space<vmem>>, vector<1x128x64xf32>
    %34 = vector.shape_cast %33 : vector<1x128x64xf32> to vector<128x64xf32>
    %35 = vector.extract_strided_slice %34 {offsets = [0, 0], sizes = [32, 16], strides = [1, 1]} : vector<128x64xf32> to vector<32x16xf32>
    %cst_24 = arith.constant dense<0.000000e+00> : vector<32x16xf32>
    %36 = tpu.matmul %32, %35, %cst_24 {dimension_numbers = #tpu.dot_dimension_numbers<[1], [0], [0], [1], [0, 0, 1, 1], [], []>} : vector<32x32xf32>, vector<32x16xf32>, vector<32x16xf32> -> vector<32x16xf32>
    %c3 = arith.constant 3 : index
    %c0_25 = arith.constant 0 : index
    %c0_26 = arith.constant 0 : index
    %37 = vector.load %arg4[%c3, %c0_25, %c0_26] : memref<5x1x128xf32, #tpu.memory_space<vmem>>, vector<1x1x128xf32>
    %38 = vector.shape_cast %37 : vector<1x1x128xf32> to vector<1x128xf32>
    %39 = vector.extract_strided_slice %38 {offsets = [0, 0], sizes = [1, 16], strides = [1, 1]} : vector<1x128xf32> to vector<1x16xf32>
    %40 = vector.broadcast %39 : vector<1x16xf32> to vector<32x16xf32>
    %41 = arith.addf %36, %40 : vector<32x16xf32>
    %cst_27 = arith.constant 2.000000e-02 : f32
    %42 = vector.broadcast %cst_27 : f32 to vector<32x16xf32>
    %43 = arith.mulf %42, %41 : vector<32x16xf32>
    %44 = arith.maximumf %41, %43 : vector<32x16xf32>
    %c3_28 = arith.constant 3 : index
    %c0_29 = arith.constant 0 : index
    %c0_30 = arith.constant 0 : index
    %45 = vector.load %arg3[%c3_28, %c0_29, %c0_30] : memref<4x128x64xf32, #tpu.memory_space<vmem>>, vector<1x128x64xf32>
    %46 = vector.shape_cast %45 : vector<1x128x64xf32> to vector<128x64xf32>
    %47 = vector.extract_strided_slice %46 {offsets = [0, 0], sizes = [16, 8], strides = [1, 1]} : vector<128x64xf32> to vector<16x8xf32>
    %cst_31 = arith.constant dense<0.000000e+00> : vector<32x8xf32>
    %48 = tpu.matmul %44, %47, %cst_31 {dimension_numbers = #tpu.dot_dimension_numbers<[1], [0], [0], [1], [0, 0, 1, 1], [], []>} : vector<32x16xf32>, vector<16x8xf32>, vector<32x8xf32> -> vector<32x8xf32>
    %c4 = arith.constant 4 : index
    %c0_32 = arith.constant 0 : index
    %c0_33 = arith.constant 0 : index
    %49 = vector.load %arg4[%c4, %c0_32, %c0_33] : memref<5x1x128xf32, #tpu.memory_space<vmem>>, vector<1x1x128xf32>
    %50 = vector.shape_cast %49 : vector<1x1x128xf32> to vector<1x128xf32>
    %51 = vector.extract_strided_slice %50 {offsets = [0, 0], sizes = [1, 8], strides = [1, 1]} : vector<1x128xf32> to vector<1x8xf32>
    %52 = vector.broadcast %51 : vector<1x8xf32> to vector<32x8xf32>
    %53 = arith.addf %48, %52 : vector<32x8xf32>
    %cst_34 = arith.constant 2.000000e-02 : f32
    %54 = vector.broadcast %cst_34 : f32 to vector<32x8xf32>
    %55 = arith.mulf %54, %53 : vector<32x8xf32>
    %56 = arith.maximumf %53, %55 : vector<32x8xf32>
    %c0_35 = arith.constant 0 : index
    %c0_36 = arith.constant 0 : index
    %57 = vector.load %arg5[%c0_35, %c0_36] : memref<8x8xf32, #tpu.memory_space<vmem>>, vector<8x8xf32>
    %cst_37 = arith.constant dense<0.000000e+00> : vector<32x8xf32>
    %58 = tpu.matmul %56, %57, %cst_37 {dimension_numbers = #tpu.dot_dimension_numbers<[1], [0], [0], [1], [0, 0, 1, 1], [], []>} : vector<32x8xf32>, vector<8x8xf32>, vector<32x8xf32> -> vector<32x8xf32>
    %c0_38 = arith.constant 0 : index
    %c0_39 = arith.constant 0 : index
    %59 = vector.load %arg6[%c0_38, %c0_39] : memref<1x8xf32, #tpu.memory_space<vmem>>, vector<1x8xf32>
    %60 = vector.broadcast %59 : vector<1x8xf32> to vector<32x8xf32>
    %61 = arith.addf %58, %60 : vector<32x8xf32>
    %cst_40 = arith.constant dense<0xFF800000> : vector<32xf32>
    %62 = vector.multi_reduction <maximumf>, %61, %cst_40 [1] : vector<32x8xf32> to vector<32xf32>
    %63 = vector.shape_cast %62 : vector<32xf32> to vector<32x1xf32>
    %64 = vector.broadcast %63 : vector<32x1xf32> to vector<32x8xf32>
    %65 = arith.subf %61, %64 : vector<32x8xf32>
    %66 = math.exp %65 : vector<32x8xf32>
    %cst_41 = arith.constant dense<0.000000e+00> : vector<32xf32>
    %67 = vector.multi_reduction <add>, %66, %cst_41 [1] : vector<32x8xf32> to vector<32xf32>
    %68 = vector.shape_cast %67 : vector<32xf32> to vector<32x1xf32>
    %69 = vector.broadcast %68 : vector<32x1xf32> to vector<32x8xf32>
    %70 = arith.divf %66, %69 : vector<32x8xf32>
    %c0_42 = arith.constant 0 : index
    %c0_43 = arith.constant 0 : index
    %71 = vector.load %arg7[%c0_42, %c0_43] : memref<8x256xf32, #tpu.memory_space<vmem>>, vector<8x256xf32>
    %cst_44 = arith.constant dense<0.000000e+00> : vector<32x256xf32>
    %72 = tpu.matmul %70, %71, %cst_44 {dimension_numbers = #tpu.dot_dimension_numbers<[1], [0], [0], [1], [0, 0, 1, 1], [], []>} : vector<32x8xf32>, vector<8x256xf32>, vector<32x256xf32> -> vector<32x256xf32>
    %73 = arith.mulf %72, %0 : vector<32x256xf32>
    %c0_45 = arith.constant 0 : index
    %c0_46 = arith.constant 0 : index
    %74 = vector.load %arg8[%c0_45, %c0_46] : memref<256x32xf32, #tpu.memory_space<vmem>>, vector<256x32xf32>
    %cst_47 = arith.constant dense<0.000000e+00> : vector<32x32xf32>
    %75 = tpu.matmul %73, %74, %cst_47 {dimension_numbers = #tpu.dot_dimension_numbers<[1], [0], [0], [1], [0, 0, 1, 1], [], []>} : vector<32x256xf32>, vector<256x32xf32>, vector<32x32xf32> -> vector<32x32xf32>
    %c0_48 = arith.constant 0 : index
    %c0_49 = arith.constant 0 : index
    %76 = vector.load %arg9[%c0_48, %c0_49] : memref<32x32xf32, #tpu.memory_space<vmem>>, vector<32x32xf32>
    tpu.vector_store %arg9[%c0_48, %c0_49], %75 {strides = array<i32>} : memref<32x32xf32, #tpu.memory_space<vmem>>, vector<32x32xf32>,
    return
  }
  func.func @transform_0(%arg0: i32) -> (i32, i32) {
    %c0_i32 = arith.constant 0 : i32
    %c0_i32_0 = arith.constant 0 : i32
    return %arg0, %c0_i32 : i32, i32
  }
  func.func @transform_1(%arg0: i32) -> (i32, i32) {
    %c0_i32 = arith.constant 0 : i32
    %c0_i32_0 = arith.constant 0 : i32
    %c0_i32_1 = arith.constant 0 : i32
    return %c0_i32, %c0_i32_0 : i32, i32
  }
  func.func @transform_2(%arg0: i32) -> (i32, i32, i32) {
    %c0_i32 = arith.constant 0 : i32
    %c0_i32_0 = arith.constant 0 : i32
    %c0_i32_1 = arith.constant 0 : i32
    %c0_i32_2 = arith.constant 0 : i32
    return %c0_i32, %c0_i32_0, %c0_i32_1 : i32, i32, i32
  }
  func.func @transform_3(%arg0: i32) -> (i32, i32, i32) {
    %c0_i32 = arith.constant 0 : i32
    %c0_i32_0 = arith.constant 0 : i32
    %c0_i32_1 = arith.constant 0 : i32
    %c0_i32_2 = arith.constant 0 : i32
    return %c0_i32, %c0_i32_0, %c0_i32_1 : i32, i32, i32
  }
  func.func @transform_4(%arg0: i32) -> (i32, i32) {
    %c0_i32 = arith.constant 0 : i32
    %c0_i32_0 = arith.constant 0 : i32
    %c0_i32_1 = arith.constant 0 : i32
    return %c0_i32, %c0_i32_0 : i32, i32
  }
  func.func @transform_5(%arg0: i32) -> (i32, i32) {
    %c0_i32 = arith.constant 0 : i32
    %c0_i32_0 = arith.constant 0 : i32
    %c0_i32_1 = arith.constant 0 : i32
    return %c0_i32, %c0_i32_0 : i32, i32
  }
  func.func @transform_6(%arg0: i32) -> (i32, i32) {
    %c0_i32 = arith.constant 0 : i32
    %c0_i32_0 = arith.constant 0 : i32
    %c0_i32_1 = arith.constant 0 : i32
    return %c0_i32, %c0_i32_0 : i32, i32
  }
  func.func @transform_7(%arg0: i32) -> (i32, i32) {
    %c0_i32 = arith.constant 0 : i32
    %c0_i32_0 = arith.constant 0 : i32
    %c0_i32_1 = arith.constant 0 : i32
    return %c0_i32, %c0_i32_0 : i32, i32
  }
  func.func @transform_8(%arg0: i32) -> (i32, i32) {
    %c0_i32 = arith.constant 0 : i32
    %c0_i32_0 = arith.constant 0 : i32
    return %arg0, %c0_i32 : i32, i32
  }
}

</mosaic_0001>

<llo_original>
// kernel: tpu_custom_call.1
$region0: #{tpu_custom_call.1}
  #allocation0 [shape = 'u32[]', space=smem, size = 0x4, offset = 0x4, fixed_abs, tag = 'smem constant byte address 0x4 - core index']
  #allocation1 [shape = 'u32[72,128]{1,0:T(1,128)}', space=vmem, size = 0x9000, scoped, tag = 'internal scratch']
  %s0 = inlined_call_operand.vmem [shape: f32[64,256], index: 0, kind: input, shape index: {}]
  %s1 = inlined_call_operand.vmem [shape: f32[256,128], index: 1, kind: input, shape index: {}]
  %s2 = inlined_call_operand.vmem [shape: f32[4,128,64], index: 2, kind: input, shape index: {}]
  %s3 = inlined_call_operand.vmem [shape: f32[5,1,128], index: 3, kind: input, shape index: {}]
  %s4 = inlined_call_operand.vmem [shape: f32[8,8], index: 4, kind: input, shape index: {}]
  %s5 = inlined_call_operand.vmem [shape: f32[1,8], index: 5, kind: input, shape index: {}]
  %s6 = inlined_call_operand.vmem [shape: f32[8,256], index: 6, kind: input, shape index: {}]
  %s7 = inlined_call_operand.vmem [shape: f32[256,32], index: 7, kind: input, shape index: {}]
  %s8 = inlined_call_operand.vmem [shape: f32[64,32], index: 8, kind: output, shape index: {}]
  %s9 = sld [smem:[#allocation0]]
  $region65: #{tpu_custom_call.1} parent=0
    _
  %s11 = ssub.s32 1, %s9
  %s12 = scalar_select 0, %s11, %s9
  loop: start=0, step=1, limit=4
  $region2: #{tpu_custom_call.1} parent=0 // loop_pre_header
    _
  $region3: #{tpu_custom_call.1} parent=0 // loop_header
    %s14 = sphi 0, %s18
    %p15 = scmp.ge.s32.totalorder %s14, 4
    %s24 = sphi 0, %s26
    %s27 = sphi 0, %s24
    %s28 = sphi 0, %s27
    %s44 = sphi 0, %s28
    %s48 = sphi 0, %s48
    %s50 = sphi 0, %s48
    %s51 = sphi 0, %s50
    %s65 = sphi 0, %s51
    %s69 = sphi 0, %s69
    %s71 = sphi 0, %s69
    %s72 = sphi 0, %s71
    %s86 = sphi 0, %s72
    %s90 = sphi 0, %s90
    %s92 = sphi 0, %s90
    %s93 = sphi 0, %s92
    %s107 = sphi 0, %s93
    %s111 = sphi 0, %s111
    %s113 = sphi 0, %s111
    %s114 = sphi 0, %s113
    %s128 = sphi 0, %s114
    %s132 = sphi 0, %s132
    %s134 = sphi 0, %s132
    %s135 = sphi 0, %s134
    %s149 = sphi 0, %s135
    %s153 = sphi 0, %s153
    %s155 = sphi 0, %s153
    %s156 = sphi 0, %s155
    %s170 = sphi 0, %s156
    %s174 = sphi 0, %s174
    %s176 = sphi 0, %s174
    %s177 = sphi 0, %s176
    %s191 = sphi 0, %s177
    %s197 = sphi 0, %s199
    %s200 = sphi 0, %s197
    %s201 = sphi 0, %s200
    %s217 = sphi 0, %s201
  $region4: #{tpu_custom_call.1} parent=0 // loop_header_branch
    %17 = sbr.rel (%p15) target = $region8
  $region5: #{tpu_custom_call.1} parent=0 // loop_body
    %s19 = ssub.s32 %s14, 1
    %s20 = ssub.s32 %s14, 2
    %s21 = sadd.s32 %s14, 1
    %s22 = ssub.s32 %s14, %s21
    %p23 = scmp.eq.s32.totalorder %s22, 0
    %s25 = sadd.s32 %s24, 1
    %s26 = scalar_select %p23, %s24, %s25
    %p29 = pneg %p23
    %p30 = scmp.eq.s32.totalorder %s14, 1
    %p31 = por %p29, %p30
    %p32 = scmp.ne.s32.totalorder %s24, %s27
    %p33 = scmp.eq.s32.totalorder %s14, 0
    %p34 = por %p32, %p33
    %p35 = scmp.ne.s32.totalorder %s24, %s27
    %p36 = scmp.eq.s32.totalorder %s19, 1
    %p37 = por %p35, %p36
    %p38 = scmp.ne.s32.totalorder %s27, %s28
    %p39 = scmp.eq.s32.totalorder %s19, 0
    %p40 = por %p38, %p39
    %p41 = scmp.ne.s32.totalorder %s27, %s28
    %p42 = scmp.eq.s32.totalorder %s20, 1
    %p43 = por %p41, %p42
    %p45 = scmp.ne.s32.totalorder %s28, %s44
    %p46 = scmp.eq.s32.totalorder %s20, 0
    %p47 = por %p45, %p46
    %s49 = sadd.s32 %s48, 1
    %p52 = scmp.eq.s32.totalorder %s14, 1
    %p53 = scmp.ne.s32.totalorder %s48, %s50
    %p54 = scmp.eq.s32.totalorder %s14, 0
    %p55 = por %p53, %p54
    %p56 = scmp.ne.s32.totalorder %s48, %s50
    %p57 = scmp.eq.s32.totalorder %s19, 1
    %p58 = por %p56, %p57
    %p59 = scmp.ne.s32.totalorder %s50, %s51
    %p60 = scmp.eq.s32.totalorder %s19, 0
    %p61 = por %p59, %p60
    %p62 = scmp.ne.s32.totalorder %s50, %s51
    %p63 = scmp.eq.s32.totalorder %s20, 1
    %p64 = por %p62, %p63
    %p66 = scmp.ne.s32.totalorder %s51, %s65
    %p67 = scmp.eq.s32.totalorder %s20, 0
    %p68 = por %p66, %p67
    %s70 = sadd.s32 %s69, 1
    %p73 = scmp.eq.s32.totalorder %s14, 1
    %p74 = scmp.ne.s32.totalorder %s69, %s71
    %p75 = scmp.eq.s32.totalorder %s14, 0
    %p76 = por %p74, %p75
    %p77 = scmp.ne.s32.totalorder %s69, %s71
    %p78 = scmp.eq.s32.totalorder %s19, 1
    %p79 = por %p77, %p78
    %p80 = scmp.ne.s32.totalorder %s71, %s72
    %p81 = scmp.eq.s32.totalorder %s19, 0
    %p82 = por %p80, %p81
    %p83 = scmp.ne.s32.totalorder %s71, %s72
    %p84 = scmp.eq.s32.totalorder %s20, 1
    %p85 = por %p83, %p84
    %p87 = scmp.ne.s32.totalorder %s72, %s86
    %p88 = scmp.eq.s32.totalorder %s20, 0
    %p89 = por %p87, %p88
    %s91 = sadd.s32 %s90, 1
    %p94 = scmp.eq.s32.totalorder %s14, 1
    %p95 = scmp.ne.s32.totalorder %s90, %s92
    %p96 = scmp.eq.s32.totalorder %s14, 0
    %p97 = por %p95, %p96
    %p98 = scmp.ne.s32.totalorder %s90, %s92
    %p99 = scmp.eq.s32.totalorder %s19, 1
    %p100 = por %p98, %p99
    %p101 = scmp.ne.s32.totalorder %s92, %s93
    %p102 = scmp.eq.s32.totalorder %s19, 0
    %p103 = por %p101, %p102
    %p104 = scmp.ne.s32.totalorder %s92, %s93
    %p105 = scmp.eq.s32.totalorder %s20, 1
    %p106 = por %p104, %p105
    %p108 = scmp.ne.s32.totalorder %s93, %s107
    %p109 = scmp.eq.s32.totalorder %s20, 0
    %p110 = por %p108, %p109
    %s112 = sadd.s32 %s111, 1
    %p115 = scmp.eq.s32.totalorder %s14, 1
    %p116 = scmp.ne.s32.totalorder %s111, %s113
    %p117 = scmp.eq.s32.totalorder %s14, 0
    %p118 = por %p116, %p117
    %p119 = scmp.ne.s32.totalorder %s111, %s113
    %p120 = scmp.eq.s32.totalorder %s19, 1
    %p121 = por %p119, %p120
    %p122 = scmp.ne.s32.totalorder %s113, %s114
    %p123 = scmp.eq.s32.totalorder %s19, 0
    %p124 = por %p122, %p123
    %p125 = scmp.ne.s32.totalorder %s113, %s114
    %p126 = scmp.eq.s32.totalorder %s20, 1
    %p127 = por %p125, %p126
    %p129 = scmp.ne.s32.totalorder %s114, %s128
    %p130 = scmp.eq.s32.totalorder %s20, 0
    %p131 = por %p129, %p130
    %s133 = sadd.s32 %s132, 1
    %p136 = scmp.eq.s32.totalorder %s14, 1
    %p137 = scmp.ne.s32.totalorder %s132, %s134
    %p138 = scmp.eq.s32.totalorder %s14, 0
    %p139 = por %p137, %p138
    %p140 = scmp.ne.s32.totalorder %s132, %s134
    %p141 = scmp.eq.s32.totalorder %s19, 1
    %p142 = por %p140, %p141
    %p143 = scmp.ne.s32.totalorder %s134, %s135
    %p144 = scmp.eq.s32.totalorder %s19, 0
    %p145 = por %p143, %p144
    %p146 = scmp.ne.s32.totalorder %s134, %s135
    %p147 = scmp.eq.s32.totalorder %s20, 1
    %p148 = por %p146, %p147
    %p150 = scmp.ne.s32.totalorder %s135, %s149
    %p151 = scmp.eq.s32.totalorder %s20, 0
    %p152 = por %p150, %p151
    %s154 = sadd.s32 %s153, 1
    %p157 = scmp.eq.s32.totalorder %s14, 1
    %p158 = scmp.ne.s32.totalorder %s153, %s155
    %p159 = scmp.eq.s32.totalorder %s14, 0
    %p160 = por %p158, %p159
    %p161 = scmp.ne.s32.totalorder %s153, %s155
    %p162 = scmp.eq.s32.totalorder %s19, 1
    %p163 = por %p161, %p162
    %p164 = scmp.ne.s32.totalorder %s155, %s156
    %p165 = scmp.eq.s32.totalorder %s19, 0
    %p166 = por %p164, %p165
    %p167 = scmp.ne.s32.totalorder %s155, %s156
    %p168 = scmp.eq.s32.totalorder %s20, 1
    %p169 = por %p167, %p168
    %p171 = scmp.ne.s32.totalorder %s156, %s170
    %p172 = scmp.eq.s32.totalorder %s20, 0
    %p173 = por %p171, %p172
    %s175 = sadd.s32 %s174, 1
    %p178 = scmp.eq.s32.totalorder %s14, 1
    %p179 = scmp.ne.s32.totalorder %s174, %s176
    %p180 = scmp.eq.s32.totalorder %s14, 0
    %p181 = por %p179, %p180
    %p182 = scmp.ne.s32.totalorder %s174, %s176
    %p183 = scmp.eq.s32.totalorder %s19, 1
    %p184 = por %p182, %p183
    %p185 = scmp.ne.s32.totalorder %s176, %s177
    %p186 = scmp.eq.s32.totalorder %s19, 0
    %p187 = por %p185, %p186
    %p188 = scmp.ne.s32.totalorder %s176, %s177
    %p189 = scmp.eq.s32.totalorder %s20, 1
    %p190 = por %p188, %p189
    %p192 = scmp.ne.s32.totalorder %s177, %s191
    %p193 = scmp.eq.s32.totalorder %s20, 0
    %p194 = por %p192, %p193
    %s195 = ssub.s32 %s14, %s21
    %p196 = scmp.eq.s32.totalorder %s195, 0
    %s198 = sadd.s32 %s197, 1
    %s199 = scalar_select %p196, %s197, %s198
    %p202 = pneg %p196
    %p203 = scmp.eq.s32.totalorder %s14, 1
    %p204 = por %p202, %p203
    %p205 = scmp.ne.s32.totalorder %s197, %s200
    %p206 = scmp.eq.s32.totalorder %s14, 0
    %p207 = por %p205, %p206
    %p208 = scmp.ne.s32.totalorder %s197, %s200
    %p209 = scmp.eq.s32.totalorder %s19, 1
    %p210 = por %p208, %p209
    %p211 = scmp.ne.s32.totalorder %s200, %s201
    %p212 = scmp.eq.s32.totalorder %s19, 0
    %p213 = por %p211, %p212
    %p214 = scmp.ne.s32.totalorder %s200, %s201
    %p215 = scmp.eq.s32.totalorder %s20, 1
    %p216 = por %p214, %p215
    %p218 = scmp.ne.s32.totalorder %s201, %s217
    %p219 = scmp.eq.s32.totalorder %s20, 0
    %p220 = por %p218, %p219
    %p221 = scmp.le.s32.totalorder 1, %s14
    %p222 = scmp.lt.s32.totalorder %s14, 3
    %p223 = pnand %p221, %p222
    %p224 = pneg %p223
    // Predicated region
    $region9: #{tpu_custom_call.1} parent=5 // pred_check
      _
    $region10: #{tpu_custom_call.1} parent=5 // pred_check_branch
      %226 = sbr.rel (%p223) target = $region12
    $region11: #{tpu_custom_call.1} parent=5 // pred_region
      %s227 = ssub.s32 %s14, 1
      // Predicated region
      $region13: #{tpu_custom_call.1} parent=11 // pred_check
        %p228 = pneg %p61
      $region14: #{tpu_custom_call.1} parent=11 // pred_check_branch
        %230 = sbr.rel (%p228) target = $region16
      $region15: #{tpu_custom_call.1} parent=11 // pred_region
        _
      $region16: #{tpu_custom_call.1} parent=11 // pred_fallthru
        _
      // Predicated region
      $region17: #{tpu_custom_call.1} parent=11 // pred_check
        %p231 = pneg %p82
      $region18: #{tpu_custom_call.1} parent=11 // pred_check_branch
        %233 = sbr.rel (%p231) target = $region20
      $region19: #{tpu_custom_call.1} parent=11 // pred_region
        _
      $region20: #{tpu_custom_call.1} parent=11 // pred_fallthru
        _
      // Predicated region
      $region21: #{tpu_custom_call.1} parent=11 // pred_check
        %p234 = pneg %p103
      $region22: #{tpu_custom_call.1} parent=11 // pred_check_branch
        %236 = sbr.rel (%p234) target = $region24
      $region23: #{tpu_custom_call.1} parent=11 // pred_region
        _
      $region24: #{tpu_custom_call.1} parent=11 // pred_fallthru
        _
      // Predicated region
      $region25: #{tpu_custom_call.1} parent=11 // pred_check
        %p237 = pneg %p124
      $region26: #{tpu_custom_call.1} parent=11 // pred_check_branch
        %239 = sbr.rel (%p237) target = $region28
      $region27: #{tpu_custom_call.1} parent=11 // pred_region
        _
      $region28: #{tpu_custom_call.1} parent=11 // pred_fallthru
        _
      // Predicated region
      $region29: #{tpu_custom_call.1} parent=11 // pred_check
        %p240 = pneg %p145
      $region30: #{tpu_custom_call.1} parent=11 // pred_check_branch
        %242 = sbr.rel (%p240) target = $region32
      $region31: #{tpu_custom_call.1} parent=11 // pred_region
        _
      $region32: #{tpu_custom_call.1} parent=11 // pred_fallthru
        _
      // Predicated region
      $region33: #{tpu_custom_call.1} parent=11 // pred_check
        %p243 = pneg %p166
      $region34: #{tpu_custom_call.1} parent=11 // pred_check_branch
        %245 = sbr.rel (%p243) target = $region36
      $region35: #{tpu_custom_call.1} parent=11 // pred_region
        _
      $region36: #{tpu_custom_call.1} parent=11 // pred_fallthru
        _
      // Predicated region
      $region37: #{tpu_custom_call.1} parent=11 // pred_check
        %p246 = pneg %p187
      $region38: #{tpu_custom_call.1} parent=11 // pred_check_branch
        %248 = sbr.rel (%p246) target = $region40
      $region39: #{tpu_custom_call.1} parent=11 // pred_region
        _
      $region40: #{tpu_custom_call.1} parent=11 // pred_fallthru
        _
    $region12: #{tpu_custom_call.1} parent=5 // pred_fallthru
      _
    %p249 = scmp.lt.s32.totalorder %s14, 2
    // Predicated region
    $region41: #{tpu_custom_call.1} parent=5 // pred_check
      %p250 = pneg %p249
    $region42: #{tpu_custom_call.1} parent=5 // pred_check_branch
      %252 = sbr.rel (%p250) target = $region44
    $region43: #{tpu_custom_call.1} parent=5 // pred_region
      // Predicated region
      $region45: #{tpu_custom_call.1} parent=43 // pred_check
        %p253 = pneg %p34
      $region46: #{tpu_custom_call.1} parent=43 // pred_check_branch
        %255 = sbr.rel (%p253) target = $region48
      $region47: #{tpu_custom_call.1} parent=43 // pred_region
        %s256 = smul.u32 4, %s14
        %p257 = scmp.lt.s32.totalorder %s256, 7
        %s258 = scalar_select %p257, %s256, 7
        %s259 = smul.addr %s258, 2
        %s260 = smul.addr %s259, 8
        %s261 = scalar_lea.vmem %s0, %s260
        %s262 = smul.u32 4, %s14
      $region48: #{tpu_custom_call.1} parent=43 // pred_fallthru
        _
    $region44: #{tpu_custom_call.1} parent=5 // pred_fallthru
      _
    %p263 = scmp.le.s32.totalorder 1, %s14
    %p264 = scmp.lt.s32.totalorder %s14, 3
    %p265 = pnand %p263, %p264
    %p266 = pneg %p265
    // Predicated region
    $region49: #{tpu_custom_call.1} parent=5 // pred_check
      _
    $region50: #{tpu_custom_call.1} parent=5 // pred_check_branch
      %268 = sbr.rel (%p265) target = $region52
    $region51: #{tpu_custom_call.1} parent=5 // pred_region
      %s269 = ssub.s32 %s14, 1
      %s270 = smul.u32 4, %s19
      %p271 = scmp.lt.s32.totalorder %s270, 7
      %s272 = scalar_select %p271, %s270, 7
      %s273 = smul.addr %s272, 2
      %s274 = smul.addr %s273, 8
      %s275 = scalar_lea.vmem %s0, %s274
      %p276 = pneg %p40
      %p277 = pneg %p37
      %p278 = pneg %p61
      %p279 = pneg %p58
      %p280 = pneg %p82
      %p281 = pneg %p79
      %p282 = pneg %p103
      %p283 = pneg %p100
      %p284 = pneg %p124
      %p285 = pneg %p121
      %p286 = pneg %p145
      %p287 = pneg %p142
      %p288 = pneg %p166
      %p289 = pneg %p163
      %p290 = pneg %p187
      %p291 = pneg %p184
      %p292 = pneg %p213
      %p293 = pneg %p210
      %s294 = smul.u32 4, %s19
      %p295 = scmp.lt.s32.totalorder %s294, 7
      %s296 = scalar_select %p295, %s294, 7
      %s297 = smul.addr %s296, 8
      %s298 = scalar_lea.vmem %s8, %s297
      %s299 = smul.u32 4, %s19
      %p300 = scmp.lt.s32.totalorder %s299, 7
      %s301 = scalar_select %p300, %s299, 7
      %s302 = smul.addr %s301, 2
      %s303 = smul.addr %s302, 8
      %s304 = scalar_lea.vmem %s0, %s303
      %s305 = smul.u32 4, %s19
      %s306 = smul.u32 4, %s19
      %p307 = scmp.lt.s32.totalorder %s306, 7
      %s308 = scalar_select %p307, %s306, 7
      %s309 = smul.addr %s308, 8
      %s310 = scalar_lea.vmem %s8, %s309
      %s311 = smul.u32 4, %s19
      %v312 = vld [vmem:[%s304] sm:$0xff]
      %v313 = vld [vmem:[%s304 + $0x8] sm:$0xff]
      %v314 = vld [vmem:[%s304 + $0x10] sm:$0xff]
      %v315 = vld [vmem:[%s304 + $0x18] sm:$0xff]
      %v316 = vld [vmem:[%s304 + $0x20] sm:$0xff]
      %v317 = vld [vmem:[%s304 + $0x28] sm:$0xff]
      %v318 = vld [vmem:[%s304 + $0x30] sm:$0xff]
      %v319 = vld [vmem:[%s304 + $0x38] sm:$0xff]
      %v320 = vld [vmem:[%s1] sm:$0xff]
      %v321 = vld [vmem:[%s1 + $0x8] sm:$0xff]
      %v322 = vld [vmem:[%s1 + $0x10] sm:$0xff]
      %v323 = vld [vmem:[%s1 + $0x18] sm:$0xff]
      %v324 = vld [vmem:[%s1 + $0x20] sm:$0xff]
      %v325 = vld [vmem:[%s1 + $0x28] sm:$0xff]
      %v326 = vld [vmem:[%s1 + $0x30] sm:$0xff]
      %v327 = vld [vmem:[%s1 + $0x38] sm:$0xff]
      %v328 = vld [vmem:[%s1 + $0x40] sm:$0xff]
      %v329 = vld [vmem:[%s1 + $0x48] sm:$0xff]
      %v330 = vld [vmem:[%s1 + $0x50] sm:$0xff]
      %v331 = vld [vmem:[%s1 + $0x58] sm:$0xff]
      %v332 = vld [vmem:[%s1 + $0x60] sm:$0xff]
      %v333 = vld [vmem:[%s1 + $0x68] sm:$0xff]
      %v334 = vld [vmem:[%s1 + $0x70] sm:$0xff]
      %v335 = vld [vmem:[%s1 + $0x78] sm:$0xff]
      %v336 = vld [vmem:[%s1 + $0x80] sm:$0xff]
      %v337 = vld [vmem:[%s1 + $0x88] sm:$0xff]
      %v338 = vld [vmem:[%s1 + $0x90] sm:$0xff]
      %v339 = vld [vmem:[%s1 + $0x98] sm:$0xff]
      %v340 = vld [vmem:[%s1 + $0xa0] sm:$0xff]
      %v341 = vld [vmem:[%s1 + $0xa8] sm:$0xff]
      %v342 = vld [vmem:[%s1 + $0xb0] sm:$0xff]
      %v343 = vld [vmem:[%s1 + $0xb8] sm:$0xff]
      %v344 = vld [vmem:[%s1 + $0xc0] sm:$0xff]
      %v345 = vld [vmem:[%s1 + $0xc8] sm:$0xff]
      %v346 = vld [vmem:[%s1 + $0xd0] sm:$0xff]
      %v347 = vld [vmem:[%s1 + $0xd8] sm:$0xff]
      %v348 = vld [vmem:[%s1 + $0xe0] sm:$0xff]
      %v349 = vld [vmem:[%s1 + $0xe8] sm:$0xff]
      %v350 = vld [vmem:[%s1 + $0xf0] sm:$0xff]
      %v351 = vld [vmem:[%s1 + $0xf8] sm:$0xff]
      %v352 = vld [vmem:[%s3] sm:$0x1]
      %v354 = vperm.slane %v352, 0
      %356 = vmatpush.msra.mxu0 %v335
      %357 = vmatpush.msra.mxu0 %v334
      %358 = vmatpush.msra.mxu0 %v333
      %359 = vmatpush.msra.mxu0 %v332
      %360 = vmatpush.msra.mxu0 %v331
      %361 = vmatpush.msra.mxu0 %v330
      %362 = vmatpush.msra.mxu0 %v329
      %363 = vmatpush.msra.mxu0 %v328
      %364 = vmatpush.msra.mxu0 %v327
      %365 = vmatpush.msra.mxu0 %v326
      %366 = vmatpush.msra.mxu0 %v325
      %367 = vmatpush.msra.mxu0 %v324
      %368 = vmatpush.msra.mxu0 %v323
      %369 = vmatpush.msra.mxu0 %v322
      %370 = vmatpush.msra.mxu0 %v321
      %371 = vmatpush.msra.mxu0 %v320
      %372 = vmatmul.f32.gmra.mxu0 %v312
      %v373 = vpop.f32.mrf.mxu0
      %v374 = vadd.f32 %v354, %v373
      %375 = vmatmul.f32.gmra.mxu0 %v314
      %v376 = vpop.f32.mrf.mxu0
      %v377 = vadd.f32 %v354, %v376
      %378 = vmatmul.f32.gmra.mxu0 %v316
      %v379 = vpop.f32.mrf.mxu0
      %v380 = vadd.f32 %v354, %v379
      %381 = vmatmul.f32.gmra.mxu0 %v318
      %v382 = vpop.f32.mrf.mxu0
      %v383 = vadd.f32 %v354, %v382
      %384 = vdwg.mxu0
      %385 = vmatpush.msra.mxu0 %v351
      %386 = vmatpush.msra.mxu0 %v350
      %387 = vmatpush.msra.mxu0 %v349
      %388 = vmatpush.msra.mxu0 %v348
      %389 = vmatpush.msra.mxu0 %v347
      %390 = vmatpush.msra.mxu0 %v346
      %391 = vmatpush.msra.mxu0 %v345
      %392 = vmatpush.msra.mxu0 %v344
      %393 = vmatpush.msra.mxu0 %v343
      %394 = vmatpush.msra.mxu0 %v342
      %395 = vmatpush.msra.mxu0 %v341
      %396 = vmatpush.msra.mxu0 %v340
      %397 = vmatpush.msra.mxu0 %v339
      %398 = vmatpush.msra.mxu0 %v338
      %399 = vmatpush.msra.mxu0 %v337
      %400 = vmatpush.msra.mxu0 %v336
      %401 = vmatmul.f32.gmra.mxu0 %v313
      %v402 = vpop.f32.mrf.mxu0
      %v403 = vadd.f32 %v374, %v402
      %404 = vmatmul.f32.gmra.mxu0 %v315
      %v405 = vpop.f32.mrf.mxu0
      %v406 = vadd.f32 %v377, %v405
      %407 = vmatmul.f32.gmra.mxu0 %v317
      %v408 = vpop.f32.mrf.mxu0
      %v409 = vadd.f32 %v380, %v408
      %410 = vmatmul.f32.gmra.mxu0 %v319
      %v411 = vpop.f32.mrf.mxu0
      %v412 = vadd.f32 %v383, %v411
      %413 = vdwg.mxu0
      %v414 = vmul.f32 %v403, 0.02
      %v415 = vmul.f32 %v406, 0.02
      %v416 = vmul.f32 %v409, 0.02
      %v417 = vmul.f32 %v412, 0.02
      %v418 = vmax.f32 %v403, %v414
      %v419 = vmax.f32 %v406, %v415
      %v420 = vmax.f32 %v409, %v416
      %v421 = vmax.f32 %v412, %v417
      %v422 = vld [vmem:[%s2] sm:$0xff]
      %v423 = vld [vmem:[%s2 + $0x8] sm:$0xff]
      %v424 = vld [vmem:[%s2 + $0x10] sm:$0xff]
      %v425 = vld [vmem:[%s2 + $0x18] sm:$0xff]
      %v426 = vld [vmem:[%s2 + $0x20] sm:$0xff]
      %v427 = vld [vmem:[%s2 + $0x28] sm:$0xff]
      %v428 = vld [vmem:[%s2 + $0x30] sm:$0xff]
      %v429 = vld [vmem:[%s2 + $0x38] sm:$0xff]
      %v430 = vld [vmem:[%s2 + $0x40] sm:$0xff]
      %v431 = vld [vmem:[%s2 + $0x48] sm:$0xff]
      %v432 = vld [vmem:[%s2 + $0x50] sm:$0xff]
      %v433 = vld [vmem:[%s2 + $0x58] sm:$0xff]
      %v434 = vld [vmem:[%s2 + $0x60] sm:$0xff]
      %v435 = vld [vmem:[%s2 + $0x68] sm:$0xff]
      %v436 = vld [vmem:[%s2 + $0x70] sm:$0xff]
      %v437 = vld [vmem:[%s2 + $0x78] sm:$0xff]
      %s438 = scalar_lea.vmem %s3, 1
      %v439 = vld [vmem:[%s438] sm:$0x1]
      %v441 = vperm.slane %v439, 0
      %443 = vmatpush.msra.mxu0 %v437
      %444 = vmatpush.msra.mxu0 %v436
      %445 = vmatpush.msra.mxu0 %v435
      %446 = vmatpush.msra.mxu0 %v434
      %447 = vmatpush.msra.mxu0 %v433
      %448 = vmatpush.msra.mxu0 %v432
      %449 = vmatpush.msra.mxu0 %v431
      %450 = vmatpush.msra.mxu0 %v430
      %451 = vmatpush.msra.mxu0 %v429
      %452 = vmatpush.msra.mxu0 %v428
      %453 = vmatpush.msra.mxu0 %v427
      %454 = vmatpush.msra.mxu0 %v426
      %455 = vmatpush.msra.mxu0 %v425
      %456 = vmatpush.msra.mxu0 %v424
      %457 = vmatpush.msra.mxu0 %v423
      %458 = vmatpush.msra.mxu0 %v422
      %459 = vmatmul.f32.gmra.mxu0 %v418
      %v460 = vpop.f32.mrf.mxu0
      %v461 = vadd.f32 %v441, %v460
      %462 = vmatmul.f32.gmra.mxu0 %v419
      %v463 = vpop.f32.mrf.mxu0
      %v464 = vadd.f32 %v441, %v463
      %465 = vmatmul.f32.gmra.mxu0 %v420
      %v466 = vpop.f32.mrf.mxu0
      %v467 = vadd.f32 %v441, %v466
      %468 = vmatmul.f32.gmra.mxu0 %v421
      %v469 = vpop.f32.mrf.mxu0
      %v470 = vadd.f32 %v441, %v469
      %471 = vdwg.mxu0
      %v472 = vmul.f32 %v461, 0.02
      %v473 = vmul.f32 %v464, 0.02
      %v474 = vmul.f32 %v467, 0.02
      %v475 = vmul.f32 %v470, 0.02
      %v476 = vmax.f32 %v461, %v472
      %v477 = vmax.f32 %v464, %v473
      %v478 = vmax.f32 %v467, %v474
      %v479 = vmax.f32 %v470, %v475
      %s480 = scalar_lea.vmem %s2, 128
      %v481 = vld [vmem:[%s480] sm:$0xff]
      %v482 = vld [vmem:[%s480 + $0x8] sm:$0xff]
      %v483 = vld [vmem:[%s480 + $0x10] sm:$0xff]
      %v484 = vld [vmem:[%s480 + $0x18] sm:$0xff]
      %v485 = vld [vmem:[%s480 + $0x20] sm:$0xff]
      %v486 = vld [vmem:[%s480 + $0x28] sm:$0xff]
      %v487 = vld [vmem:[%s480 + $0x30] sm:$0xff]
      %v488 = vld [vmem:[%s480 + $0x38] sm:$0xff]
      %s489 = scalar_lea.vmem %s3, 2
      %v490 = vld [vmem:[%s489] sm:$0x1]
      %v492 = vperm.slane %v490, 0
      %vm494 = vcmask 523264
      %v496 = vsel %vm494, %v476, 0
      %v499 = vsel %vm494, %v477, 0
      %v502 = vsel %vm494, %v478, 0
      %v505 = vsel %vm494, %v479, 0
      %507 = vmatpush.msra.mxu0 0.0
      %508 = vmatpush.msra.mxu0 0.0
      %509 = vmatpush.msra.mxu0 0.0
      %510 = vmatpush.msra.mxu0 0.0
      %511 = vmatpush.msra.mxu0 0.0
      %512 = vmatpush.msra.mxu0 0.0
      %513 = vmatpush.msra.mxu0 0.0
      %514 = vmatpush.msra.mxu0 0.0
      %515 = vmatpush.msra.mxu0 %v488
      %516 = vmatpush.msra.mxu0 %v487
      %517 = vmatpush.msra.mxu0 %v486
      %518 = vmatpush.msra.mxu0 %v485
      %519 = vmatpush.msra.mxu0 %v484
      %520 = vmatpush.msra.mxu0 %v483
      %521 = vmatpush.msra.mxu0 %v482
      %522 = vmatpush.msra.mxu0 %v481
      %523 = vmatmul.f32.gmra.mxu0 %v496
      %v524 = vpop.f32.mrf.mxu0
      %v525 = vadd.f32 %v492, %v524
      %526 = vmatmul.f32.gmra.mxu0 %v499
      %v527 = vpop.f32.mrf.mxu0
      %v528 = vadd.f32 %v492, %v527
      %529 = vmatmul.f32.gmra.mxu0 %v502
      %v530 = vpop.f32.mrf.mxu0
      %v531 = vadd.f32 %v492, %v530
      %532 = vmatmul.f32.gmra.mxu0 %v505
      %v533 = vpop.f32.mrf.mxu0
      %v534 = vadd.f32 %v492, %v533
      %535 = vdwg.mxu0
      %v536 = vmul.f32 %v525, 0.02
      %v537 = vmul.f32 %v528, 0.02
      %v538 = vmul.f32 %v531, 0.02
      %v539 = vmul.f32 %v534, 0.02
      %v540 = vmax.f32 %v525, %v536
      %v541 = vmax.f32 %v528, %v537
      %v542 = vmax.f32 %v531, %v538
      %v543 = vmax.f32 %v534, %v539
      %s544 = scalar_lea.vmem %s2, 256
      %v545 = vld [vmem:[%s544] sm:$0xff]
      %v546 = vld [vmem:[%s544 + $0x8] sm:$0xff]
      %v547 = vld [vmem:[%s544 + $0x10] sm:$0xff]
      %v548 = vld [vmem:[%s544 + $0x18] sm:$0xff]
      %s549 = scalar_lea.vmem %s3, 3
      %v550 = vld [vmem:[%s549] sm:$0x1]
      %v552 = vperm.slane %v550, 0
      %vm554 = vcmask 261120
      %v556 = vsel %vm554, %v540, 0
      %v559 = vsel %vm554, %v541, 0
      %v562 = vsel %vm554, %v542, 0
      %v565 = vsel %vm554, %v543, 0
      %567 = vmatpush.msra.mxu0 0.0
      %568 = vmatpush.msra.mxu0 0.0
      %569 = vmatpush.msra.mxu0 0.0
      %570 = vmatpush.msra.mxu0 0.0
      %571 = vmatpush.msra.mxu0 0.0
      %572 = vmatpush.msra.mxu0 0.0
      %573 = vmatpush.msra.mxu0 0.0
      %574 = vmatpush.msra.mxu0 0.0
      %575 = vmatpush.msra.mxu0 0.0
      %576 = vmatpush.msra.mxu0 0.0
      %577 = vmatpush.msra.mxu0 0.0
      %578 = vmatpush.msra.mxu0 0.0
      %579 = vmatpush.msra.mxu0 %v548
      %580 = vmatpush.msra.mxu0 %v547
      %581 = vmatpush.msra.mxu0 %v546
      %582 = vmatpush.msra.mxu0 %v545
      %583 = vmatmul.f32.gmra.mxu0 %v556
      %v584 = vpop.f32.mrf.mxu0
      %v585 = vadd.f32 %v552, %v584
      %586 = vmatmul.f32.gmra.mxu0 %v559
      %v587 = vpop.f32.mrf.mxu0
      %v588 = vadd.f32 %v552, %v587
      %589 = vmatmul.f32.gmra.mxu0 %v562
      %v590 = vpop.f32.mrf.mxu0
      %v591 = vadd.f32 %v552, %v590
      %592 = vmatmul.f32.gmra.mxu0 %v565
      %v593 = vpop.f32.mrf.mxu0
      %v594 = vadd.f32 %v552, %v593
      %595 = vdwg.mxu0
      %v596 = vmul.f32 %v585, 0.02
      %v597 = vmul.f32 %v588, 0.02
      %v598 = vmul.f32 %v591, 0.02
      %v599 = vmul.f32 %v594, 0.02
      %v600 = vmax.f32 %v585, %v596
      %v601 = vmax.f32 %v588, %v597
      %v602 = vmax.f32 %v591, %v598
      %v603 = vmax.f32 %v594, %v599
      %s604 = scalar_lea.vmem %s2, 384
      %v605 = vld [vmem:[%s604] sm:$0xff]
      %v606 = vld [vmem:[%s604 + $0x8] sm:$0xff]
      %s607 = scalar_lea.vmem %s3, 4
      %v608 = vld [vmem:[%s607] sm:$0x1]
      %v610 = vperm.slane %v608, 0
      %vm612 = vcmask 130048
      %v614 = vsel %vm612, %v600, 0
      %v617 = vsel %vm612, %v601, 0
      %v620 = vsel %vm612, %v602, 0
      %v623 = vsel %vm612, %v603, 0
      %625 = vmatpush.msra.mxu0 0.0
      %626 = vmatpush.msra.mxu0 0.0
      %627 = vmatpush.msra.mxu0 0.0
      %628 = vmatpush.msra.mxu0 0.0
      %629 = vmatpush.msra.mxu0 0.0
      %630 = vmatpush.msra.mxu0 0.0
      %631 = vmatpush.msra.mxu0 0.0
      %632 = vmatpush.msra.mxu0 0.0
      %633 = vmatpush.msra.mxu0 0.0
      %634 = vmatpush.msra.mxu0 0.0
      %635 = vmatpush.msra.mxu0 0.0
      %636 = vmatpush.msra.mxu0 0.0
      %637 = vmatpush.msra.mxu0 0.0
      %638 = vmatpush.msra.mxu0 0.0
      %639 = vmatpush.msra.mxu0 %v606
      %640 = vmatpush.msra.mxu0 %v605
      %641 = vmatmul.f32.gmra.mxu0 %v614
      %v642 = vpop.f32.mrf.mxu0
      %v643 = vadd.f32 %v610, %v642
      %644 = vmatmul.f32.gmra.mxu0 %v617
      %v645 = vpop.f32.mrf.mxu0
      %v646 = vadd.f32 %v610, %v645
      %647 = vmatmul.f32.gmra.mxu0 %v620
      %v648 = vpop.f32.mrf.mxu0
      %v649 = vadd.f32 %v610, %v648
      %650 = vmatmul.f32.gmra.mxu0 %v623
      %v651 = vpop.f32.mrf.mxu0
      %v652 = vadd.f32 %v610, %v651
      %653 = vdwg.mxu0
      %v654 = vmul.f32 %v643, 0.02
      %v655 = vmul.f32 %v646, 0.02
      %v656 = vmul.f32 %v649, 0.02
      %v657 = vmul.f32 %v652, 0.02
      %v658 = vmax.f32 %v643, %v654
      %v659 = vmax.f32 %v646, %v655
      %v660 = vmax.f32 %v649, %v656
      %v661 = vmax.f32 %v652, %v657
      %v662 = vld [vmem:[%s4] sm:$0xff]
      %v663 = vld [vmem:[%s5] sm:$0x1]
      %v665 = vperm.slane %v663, 0
      %vm667 = vcmask 64512
      %v669 = vsel %vm667, %v658, 0
      %v672 = vsel %vm667, %v659, 0
      %v675 = vsel %vm667, %v660, 0
      %v678 = vsel %vm667, %v661, 0
      %680 = vmatpush.msra.mxu0 0.0
      %681 = vmatpush.msra.mxu0 0.0
      %682 = vmatpush.msra.mxu0 0.0
      %683 = vmatpush.msra.mxu0 0.0
      %684 = vmatpush.msra.mxu0 0.0
      %685 = vmatpush.msra.mxu0 0.0
      %686 = vmatpush.msra.mxu0 0.0
      %687 = vmatpush.msra.mxu0 0.0
      %688 = vmatpush.msra.mxu0 0.0
      %689 = vmatpush.msra.mxu0 0.0
      %690 = vmatpush.msra.mxu0 0.0
      %691 = vmatpush.msra.mxu0 0.0
      %692 = vmatpush.msra.mxu0 0.0
      %693 = vmatpush.msra.mxu0 0.0
      %694 = vmatpush.msra.mxu0 0.0
      %695 = vmatpush.msra.mxu0 %v662
      %696 = vmatmul.f32.gmra.mxu0 %v669
      %v697 = vpop.f32.mrf.mxu0
      %v698 = vadd.f32 %v665, %v697
      %699 = vmatmul.f32.gmra.mxu0 %v672
      %v700 = vpop.f32.mrf.mxu0
      %v701 = vadd.f32 %v665, %v700
      %702 = vmatmul.f32.gmra.mxu0 %v675
      %v703 = vpop.f32.mrf.mxu0
      %v704 = vadd.f32 %v665, %v703
      %705 = vmatmul.f32.gmra.mxu0 %v678
      %v706 = vpop.f32.mrf.mxu0
      %v707 = vadd.f32 %v665, %v706
      %708 = vdwg.mxu0
      %v709 = vsel %vm667, %v698, -inf
      %710 = vmax.xlane.f32.xlu0 %v709
      %v711 = vpop.xlane.xlu0 %710
      %v712 = vsel %vm667, %v701, -inf
      %713 = vmax.xlane.f32.xlu0 %v712
      %v714 = vpop.xlane.xlu0 %713
      %v715 = vsel %vm667, %v704, -inf
      %716 = vmax.xlane.f32.xlu0 %v715
      %v717 = vpop.xlane.xlu0 %716
      %v718 = vsel %vm667, %v707, -inf
      %719 = vmax.xlane.f32.xlu0 %v718
      %v720 = vpop.xlane.xlu0 %719
      %v721 = vsub.f32 %v698, %v711
      %v722 = vsub.f32 %v701, %v714
      %v723 = vsub.f32 %v704, %v717
      %v724 = vsub.f32 %v707, %v720
      %v725 = vmul.f32 %v721, 1.442695
      %v726 = vpow.pop %v725
      %v727 = vmul.f32 %v722, 1.442695
      %v728 = vpow.pop %v727
      %v729 = vmul.f32 %v723, 1.442695
      %v730 = vpow.pop %v729
      %v731 = vmul.f32 %v724, 1.442695
      %v732 = vpow.pop %v731
      %v733 = vsel %vm667, %v726, 0.0
      %734 = vadd.xlane.f32.xlu0 %v733
      %v735 = vpop.xlane.xlu0 %734
      %v736 = vsel %vm667, %v728, 0.0
      %737 = vadd.xlane.f32.xlu0 %v736
      %v738 = vpop.xlane.xlu0 %737
      %v739 = vsel %vm667, %v730, 0.0
      %740 = vadd.xlane.f32.xlu0 %v739
      %v741 = vpop.xlane.xlu0 %740
      %v742 = vsel %vm667, %v732, 0.0
      %743 = vadd.xlane.f32.xlu0 %v742
      %v744 = vpop.xlane.xlu0 %743
      %v745 = vrcp.pop %v735
      %v746 = vmul.f32 %v735, %v745
      %v747 = vsub.f32 1.0, %v746
      %v748 = vmul.f32 %v745, %v747
      %v749 = vadd.f32 %v745, %v748
      %vm750 = vweird.f32 %v735
      %vm751 = vweird.f32 %v745
      %vm752 = vmor %vm750, %vm751
      %v753 = vsel %vm752, %v745, %v749
      %v754 = vand.u32 2147483647, %v735
      %vm755 = vcmp.eq.f32.partialorder %v754, 8.507059e+37
      %v756 = vand.u32 %v735, 2147483648
      %v757 = vor.u32 1.1754944e-38, %v756
      %v758 = vsel %vm755, %v757, %v753
      %v759 = vmul.f32 %v726, %v758
      %v760 = vrcp.pop %v738
      %v761 = vmul.f32 %v738, %v760
      %v762 = vsub.f32 1.0, %v761
      %v763 = vmul.f32 %v760, %v762
      %v764 = vadd.f32 %v760, %v763
      %vm765 = vweird.f32 %v738
      %vm766 = vweird.f32 %v760
      %vm767 = vmor %vm765, %vm766
      %v768 = vsel %vm767, %v760, %v764
      %v769 = vand.u32 2147483647, %v738
      %vm770 = vcmp.eq.f32.partialorder %v769, 8.507059e+37
      %v771 = vand.u32 %v738, 2147483648
      %v772 = vor.u32 1.1754944e-38, %v771
      %v773 = vsel %vm770, %v772, %v768
      %v774 = vmul.f32 %v728, %v773
      %v775 = vrcp.pop %v741
      %v776 = vmul.f32 %v741, %v775
      %v777 = vsub.f32 1.0, %v776
      %v778 = vmul.f32 %v775, %v777
      %v779 = vadd.f32 %v775, %v778
      %vm780 = vweird.f32 %v741
      %vm781 = vweird.f32 %v775
      %vm782 = vmor %vm780, %vm781
      %v783 = vsel %vm782, %v775, %v779
      %v784 = vand.u32 2147483647, %v741
      %vm785 = vcmp.eq.f32.partialorder %v784, 8.507059e+37
      %v786 = vand.u32 %v741, 2147483648
      %v787 = vor.u32 1.1754944e-38, %v786
      %v788 = vsel %vm785, %v787, %v783
      %v789 = vmul.f32 %v730, %v788
      %v790 = vrcp.pop %v744
      %v791 = vmul.f32 %v744, %v790
      %v792 = vsub.f32 1.0, %v791
      %v793 = vmul.f32 %v790, %v792
      %v794 = vadd.f32 %v790, %v793
      %vm795 = vweird.f32 %v744
      %vm796 = vweird.f32 %v790
      %vm797 = vmor %vm795, %vm796
      %v798 = vsel %vm797, %v790, %v794
      %v799 = vand.u32 2147483647, %v744
      %vm800 = vcmp.eq.f32.partialorder %v799, 8.507059e+37
      %v801 = vand.u32 %v744, 2147483648
      %v802 = vor.u32 1.1754944e-38, %v801
      %v803 = vsel %vm800, %v802, %v798
      %v804 = vmul.f32 %v732, %v803
      %v805 = vld [vmem:[%s6] sm:$0xff]
      %v806 = vld [vmem:[%s6 + $0x8] sm:$0xff]
      %v808 = vsel %vm667, %v759, 0
      %v811 = vsel %vm667, %v774, 0
      %v814 = vsel %vm667, %v789, 0
      %v817 = vsel %vm667, %v804, 0
      %819 = vmatpush.msra.mxu0 0.0
      %820 = vmatpush.msra.mxu0 0.0
      %821 = vmatpush.msra.mxu0 0.0
      %822 = vmatpush.msra.mxu0 0.0
      %823 = vmatpush.msra.mxu0 0.0
      %824 = vmatpush.msra.mxu0 0.0
      %825 = vmatpush.msra.mxu0 0.0
      %826 = vmatpush.msra.mxu0 0.0
      %827 = vmatpush.msra.mxu0 0.0
      %828 = vmatpush.msra.mxu0 0.0
      %829 = vmatpush.msra.mxu0 0.0
      %830 = vmatpush.msra.mxu0 0.0
      %831 = vmatpush.msra.mxu0 0.0
      %832 = vmatpush.msra.mxu0 0.0
      %833 = vmatpush.msra.mxu0 0.0
      %834 = vmatpush.msra.mxu0 %v805
      %835 = vmatmul.f32.gmra.mxu0 %v808
      %v836 = vpop.f32.mrf.mxu0
      %v837 = vadd.f32 0.0, %v836
      %838 = vmatmul.f32.gmra.mxu0 %v811
      %v839 = vpop.f32.mrf.mxu0
      %v840 = vadd.f32 0.0, %v839
      %841 = vmatmul.f32.gmra.mxu0 %v814
      %v842 = vpop.f32.mrf.mxu0
      %v843 = vadd.f32 0.0, %v842
      %844 = vmatmul.f32.gmra.mxu0 %v817
      %v845 = vpop.f32.mrf.mxu0
      %v846 = vadd.f32 0.0, %v845
      %847 = vdwg.mxu0
      %848 = vmatpush.msra.mxu0 0.0
      %849 = vmatpush.msra.mxu0 0.0
      %850 = vmatpush.msra.mxu0 0.0
      %851 = vmatpush.msra.mxu0 0.0
      %852 = vmatpush.msra.mxu0 0.0
      %853 = vmatpush.msra.mxu0 0.0
      %854 = vmatpush.msra.mxu0 0.0
      %855 = vmatpush.msra.mxu0 0.0
      %856 = vmatpush.msra.mxu0 0.0
      %857 = vmatpush.msra.mxu0 0.0
      %858 = vmatpush.msra.mxu0 0.0
      %859 = vmatpush.msra.mxu0 0.0
      %860 = vmatpush.msra.mxu0 0.0
      %861 = vmatpush.msra.mxu0 0.0
      %862 = vmatpush.msra.mxu0 0.0
      %863 = vmatpush.msra.mxu0 %v806
      %864 = vmatmul.f32.gmra.mxu0 %v808
      %v865 = vpop.f32.mrf.mxu0
      %v866 = vadd.f32 0.0, %v865
      %867 = vmatmul.f32.gmra.mxu0 %v811
      %v868 = vpop.f32.mrf.mxu0
      %v869 = vadd.f32 0.0, %v868
      %870 = vmatmul.f32.gmra.mxu0 %v814
      %v871 = vpop.f32.mrf.mxu0
      %v872 = vadd.f32 0.0, %v871
      %873 = vmatmul.f32.gmra.mxu0 %v817
      %v874 = vpop.f32.mrf.mxu0
      %v875 = vadd.f32 0.0, %v874
      %876 = vdwg.mxu0
      %v877 = vmul.f32 %v837, %v312
      %v878 = vmul.f32 %v866, %v313
      %v879 = vmul.f32 %v840, %v314
      %v880 = vmul.f32 %v869, %v315
      %v881 = vmul.f32 %v843, %v316
      %v882 = vmul.f32 %v872, %v317
      %v883 = vmul.f32 %v846, %v318
      %v884 = vmul.f32 %v875, %v319
      %v885 = vld [vmem:[%s7] sm:$0xff]
      %v886 = vld [vmem:[%s7 + $0x8] sm:$0xff]
      %v887 = vld [vmem:[%s7 + $0x10] sm:$0xff]
      %v888 = vld [vmem:[%s7 + $0x18] sm:$0xff]
      %v889 = vld [vmem:[%s7 + $0x20] sm:$0xff]
      %v890 = vld [vmem:[%s7 + $0x28] sm:$0xff]
      %v891 = vld [vmem:[%s7 + $0x30] sm:$0xff]
      %v892 = vld [vmem:[%s7 + $0x38] sm:$0xff]
      %v893 = vld [vmem:[%s7 + $0x40] sm:$0xff]
      %v894 = vld [vmem:[%s7 + $0x48] sm:$0xff]
      %v895 = vld [vmem:[%s7 + $0x50] sm:$0xff]
      %v896 = vld [vmem:[%s7 + $0x58] sm:$0xff]
      %v897 = vld [vmem:[%s7 + $0x60] sm:$0xff]
      %v898 = vld [vmem:[%s7 + $0x68] sm:$0xff]
      %v899 = vld [vmem:[%s7 + $0x70] sm:$0xff]
      %v900 = vld [vmem:[%s7 + $0x78] sm:$0xff]
      %v901 = vld [vmem:[%s7 + $0x80] sm:$0xff]
      %v902 = vld [vmem:[%s7 + $0x88] sm:$0xff]
      %v903 = vld [vmem:[%s7 + $0x90] sm:$0xff]
      %v904 = vld [vmem:[%s7 + $0x98] sm:$0xff]
      %v905 = vld [vmem:[%s7 + $0xa0] sm:$0xff]
      %v906 = vld [vmem:[%s7 + $0xa8] sm:$0xff]
      %v907 = vld [vmem:[%s7 + $0xb0] sm:$0xff]
      %v908 = vld [vmem:[%s7 + $0xb8] sm:$0xff]
      %v909 = vld [vmem:[%s7 + $0xc0] sm:$0xff]
      %v910 = vld [vmem:[%s7 + $0xc8] sm:$0xff]
      %v911 = vld [vmem:[%s7 + $0xd0] sm:$0xff]
      %v912 = vld [vmem:[%s7 + $0xd8] sm:$0xff]
      %v913 = vld [vmem:[%s7 + $0xe0] sm:$0xff]
      %v914 = vld [vmem:[%s7 + $0xe8] sm:$0xff]
      %v915 = vld [vmem:[%s7 + $0xf0] sm:$0xff]
      %v916 = vld [vmem:[%s7 + $0xf8] sm:$0xff]
      %917 = vmatpush.msra.mxu0 %v900
      %918 = vmatpush.msra.mxu0 %v899
      %919 = vmatpush.msra.mxu0 %v898
      %920 = vmatpush.msra.mxu0 %v897
      %921 = vmatpush.msra.mxu0 %v896
      %922 = vmatpush.msra.mxu0 %v895
      %923 = vmatpush.msra.mxu0 %v894
      %924 = vmatpush.msra.mxu0 %v893
      %925 = vmatpush.msra.mxu0 %v892
      %926 = vmatpush.msra.mxu0 %v891
      %927 = vmatpush.msra.mxu0 %v890
      %928 = vmatpush.msra.mxu0 %v889
      %929 = vmatpush.msra.mxu0 %v888
      %930 = vmatpush.msra.mxu0 %v887
      %931 = vmatpush.msra.mxu0 %v886
      %932 = vmatpush.msra.mxu0 %v885
      %933 = vmatmul.f32.gmra.mxu0 %v877
      %v934 = vpop.f32.mrf.mxu0
      %v935 = vadd.f32 0.0, %v934
      %936 = vmatmul.f32.gmra.mxu0 %v879
      %v937 = vpop.f32.mrf.mxu0
      %v938 = vadd.f32 0.0, %v937
      %939 = vmatmul.f32.gmra.mxu0 %v881
      %v940 = vpop.f32.mrf.mxu0
      %v941 = vadd.f32 0.0, %v940
      %942 = vmatmul.f32.gmra.mxu0 %v883
      %v943 = vpop.f32.mrf.mxu0
      %v944 = vadd.f32 0.0, %v943
      %945 = vdwg.mxu0
      %946 = vmatpush.msra.mxu0 %v916
      %947 = vmatpush.msra.mxu0 %v915
      %948 = vmatpush.msra.mxu0 %v914
      %949 = vmatpush.msra.mxu0 %v913
      %950 = vmatpush.msra.mxu0 %v912
      %951 = vmatpush.msra.mxu0 %v911
      %952 = vmatpush.msra.mxu0 %v910
      %953 = vmatpush.msra.mxu0 %v909
      %954 = vmatpush.msra.mxu0 %v908
      %955 = vmatpush.msra.mxu0 %v907
      %956 = vmatpush.msra.mxu0 %v906
      %957 = vmatpush.msra.mxu0 %v905
      %958 = vmatpush.msra.mxu0 %v904
      %959 = vmatpush.msra.mxu0 %v903
      %960 = vmatpush.msra.mxu0 %v902
      %961 = vmatpush.msra.mxu0 %v901
      %962 = vmatmul.f32.gmra.mxu0 %v878
      %v963 = vpop.f32.mrf.mxu0
      %v964 = vadd.f32 %v935, %v963
      %965 = vmatmul.f32.gmra.mxu0 %v880
      %v966 = vpop.f32.mrf.mxu0
      %v967 = vadd.f32 %v938, %v966
      %968 = vmatmul.f32.gmra.mxu0 %v882
      %v969 = vpop.f32.mrf.mxu0
      %v970 = vadd.f32 %v941, %v969
      %971 = vmatmul.f32.gmra.mxu0 %v884
      %v972 = vpop.f32.mrf.mxu0
      %v973 = vadd.f32 %v944, %v972
      %974 = vdwg.mxu0
      %975 = vst.msk [vmem:[%s310] sm:$0xff] %vm554, %v964
      %976 = vst.msk [vmem:[%s310 + $0x8] sm:$0xff] %vm554, %v967
      %977 = vst.msk [vmem:[%s310 + $0x10] sm:$0xff] %vm554, %v970
      %978 = vst.msk [vmem:[%s310 + $0x18] sm:$0xff] %vm554, %v973
      %s979 = smul.u32 4, %s19
      %p980 = scmp.lt.s32.totalorder %s979, 7
      %s981 = scalar_select %p980, %s979, 7
      %s982 = smul.addr %s981, 8
      %s983 = scalar_lea.vmem %s8, %s982
      // Predicated region
      $region53: #{tpu_custom_call.1} parent=51 // pred_check
        %p984 = pneg %p210
      $region54: #{tpu_custom_call.1} parent=51 // pred_check_branch
        %986 = sbr.rel (%p984) target = $region56
      $region55: #{tpu_custom_call.1} parent=51 // pred_region
        %s987 = smul.u32 4, %s19
      $region56: #{tpu_custom_call.1} parent=51 // pred_fallthru
        _
    $region52: #{tpu_custom_call.1} parent=5 // pred_fallthru
      _
    %p988 = scmp.le.s32.totalorder 2, %s14
    // Predicated region
    $region57: #{tpu_custom_call.1} parent=5 // pred_check
      %p989 = pneg %p988
    $region58: #{tpu_custom_call.1} parent=5 // pred_check_branch
      %991 = sbr.rel (%p989) target = $region60
    $region59: #{tpu_custom_call.1} parent=5 // pred_region
      %s992 = ssub.s32 %s14, 2
      // Predicated region
      $region61: #{tpu_custom_call.1} parent=59 // pred_check
        %p993 = pneg %p216
      $region62: #{tpu_custom_call.1} parent=59 // pred_check_branch
        %995 = sbr.rel (%p993) target = $region64
      $region63: #{tpu_custom_call.1} parent=59 // pred_region
        %s996 = smul.u32 4, %s20
        %p997 = scmp.lt.s32.totalorder %s996, 7
        %s998 = scalar_select %p997, %s996, 7
        %s999 = smul.addr %s998, 8
        %s1000 = scalar_lea.vmem %s8, %s999
      $region64: #{tpu_custom_call.1} parent=59 // pred_fallthru
        _
    $region60: #{tpu_custom_call.1} parent=5 // pred_fallthru
      _
  $region6: #{tpu_custom_call.1} parent=0 // loop_footer
    %s18 = sadd.s32 1, %s14
  $region7: #{tpu_custom_call.1} parent=0 // loop_footer_branch
    %13 = sbr.rel target = $region3
  $region8: #{tpu_custom_call.1} parent=0 // loop_exit
    _

</llo_original>
